<compile_context>
chip_gen: v5e
topology: v5e:2x2
jax: 0.10.0
libtpu: 0.0.40
codegen_flags: <defaults>
</compile_context>

<pallas_src>
import functools

import jax
import jax.numpy as jnp
from jax.experimental import pallas as pl
from jax.experimental.pallas import tpu as pltpu


def _round_up(x, m):
    return (x + m - 1) // m * m


# ---------------------------------------------------------------------------
# Kernel 1: feature transform   XW = X @ W      (bf16 in, f32 accumulate)
# ---------------------------------------------------------------------------
def transform_kernel(x_ref, w_ref, xw_ref):
    xw_ref[...] = jnp.dot(
        x_ref[...], w_ref[...], preferred_element_type=jnp.float32
    ).astype(xw_ref.dtype)


# ---------------------------------------------------------------------------
# Kernel 2: aggregation   out = act(A_hat @ XW + b)
#   grid = (row tiles, k tiles); k is the reduction axis (last in grid) with
#   an f32 VMEM accumulator; activation applied at the final k step.
# ---------------------------------------------------------------------------
def aggregate_kernel(a_ref, xw_ref, b_ref, out_ref, acc_ref, *,
                     activation, valid_cols):
    k = pl.program_id(1)

    @pl.when(k == 0)
    def _():
        acc_ref[...] = jnp.zeros_like(acc_ref)

    acc_ref[...] += jnp.dot(
        a_ref[...], xw_ref[...], preferred_element_type=jnp.float32
    )

    @pl.when(k == pl.num_programs(1) - 1)
    def _():
        z = acc_ref[...] + b_ref[...]
        if activation == "relu":
            out_ref[...] = jnp.maximum(z, 0.0).astype(out_ref.dtype)
        else:  # masked log_softmax over the first `valid_cols` lanes
            col = jax.lax.broadcasted_iota(jnp.int32, z.shape, 1)
            valid = col < valid_cols
            zm = jnp.where(valid, z, -jnp.inf)
            m = jnp.max(zm, axis=1, keepdims=True)
            s = zm - m
            p = jnp.where(valid, jnp.exp(s), 0.0)
            lse = jnp.log(jnp.sum(p, axis=1, keepdims=True))
            out_ref[...] = jnp.where(valid, s - lse, 0.0).astype(out_ref.dtype)


# ---------------------------------------------------------------------------
# pallas_call wrappers
# ---------------------------------------------------------------------------
def _transform(x_p, w_p, tile_m, out_dtype):
    n_pad, f_pad = x_p.shape
    h_pad = w_p.shape[1]
    return pl.pallas_call(
        transform_kernel,
        out_shape=jax.ShapeDtypeStruct((n_pad, h_pad), out_dtype),
        grid_spec=pltpu.PrefetchScalarGridSpec(
            num_scalar_prefetch=0,
            grid=(n_pad // tile_m,),
            in_specs=[
                pl.BlockSpec((tile_m, f_pad), lambda i: (i, 0)),
                pl.BlockSpec((f_pad, h_pad), lambda i: (0, 0)),
            ],
            out_specs=pl.BlockSpec((tile_m, h_pad), lambda i: (i, 0)),
        ),
        compiler_params=pltpu.CompilerParams(
            dimension_semantics=("parallel",)),
    )(x_p, w_p)


def _aggregate(a_p, xw_p, b_p, tile_m, tile_k, activation, valid_cols,
               out_dtype):
    n_pad = a_p.shape[0]
    h_pad = xw_p.shape[1]
    out_bytes = jnp.dtype(out_dtype).itemsize

    # double-buffered input/output blocks + f32 accumulator + headroom
    vmem_bytes = int(
        2 * (tile_m * tile_k * 2)            # A_hat block (bf16)
        + 2 * (tile_k * h_pad * 2)           # XW block (bf16)
        + 2 * (h_pad * 4)                    # bias
        + 2 * (tile_m * h_pad * out_bytes)   # output block
        + tile_m * h_pad * 4                 # accumulator scratch
        + (8 << 20)                          # headroom
    )
    cost = pl.CostEstimate(
        flops=2 * n_pad * n_pad * h_pad,
        transcendentals=n_pad * h_pad if activation == "log_softmax" else 0,
        bytes_accessed=(n_pad * n_pad * 2                     # A_hat
                        + (n_pad // tile_m) * n_pad * h_pad * 2  # XW re-reads
                        + h_pad * 4
                        + n_pad * h_pad * out_bytes),
    )
    kernel = functools.partial(
        aggregate_kernel, activation=activation, valid_cols=valid_cols)

    return pl.pallas_call(
        kernel,
        out_shape=jax.ShapeDtypeStruct((n_pad, h_pad), out_dtype),
        grid_spec=pltpu.PrefetchScalarGridSpec(
            num_scalar_prefetch=0,
            grid=(n_pad // tile_m, n_pad // tile_k),
            in_specs=[
                pl.BlockSpec((tile_m, tile_k), lambda i, k: (i, k)),
                pl.BlockSpec((tile_k, h_pad), lambda i, k: (k, 0)),
                pl.BlockSpec((1, h_pad), lambda i, k: (0, 0)),
            ],
            out_specs=pl.BlockSpec((tile_m, h_pad), lambda i, k: (i, 0)),
            scratch_shapes=[pltpu.VMEM((tile_m, h_pad), jnp.float32)],
        ),
        compiler_params=pltpu.CompilerParams(
            dimension_semantics=("parallel", "arbitrary"),
            vmem_limit_bytes=vmem_bytes,
        ),
        cost_estimate=cost,
    )(a_p, xw_p, b_p)


def gcn_forward(a_hat, x, w1, b1, w2, b2):
    n = a_hat.shape[0]
    f_in = x.shape[1]
    hid = w1.shape[1]
    ncls = w2.shape[1]

    # 128-aligned tiles: big enough to fill the MXU, small enough for v7x VMEM.
    tile = 256 if n > 256 else _round_up(max(n, 8), 128)
    n_pad = _round_up(n, tile)
    f_pad = _round_up(f_in, 128)
    h_pad = _round_up(hid, 128)
    c_pad = _round_up(ncls, 128)

    bf = jnp.bfloat16
    a_p = jnp.zeros((n_pad, n_pad), bf).at[:n, :n].set(a_hat.astype(bf))
    x_p = jnp.zeros((n_pad, f_pad), bf).at[:n, :f_in].set(x.astype(bf))
    w1_p = jnp.zeros((f_pad, h_pad), bf).at[:f_in, :hid].set(w1.astype(bf))
    b1_p = jnp.zeros((1, h_pad), jnp.float32).at[:, :hid].set(
        jnp.reshape(b1, (1, -1)).astype(jnp.float32))
    w2_p = jnp.zeros((h_pad, c_pad), bf).at[:hid, :ncls].set(w2.astype(bf))
    b2_p = jnp.zeros((1, c_pad), jnp.float32).at[:, :ncls].set(
        jnp.reshape(b2, (1, -1)).astype(jnp.float32))

    # layer 1: transform -> aggregate (relu fused into the final k step)
    xw1 = _transform(x_p, w1_p, tile, bf)
    h = _aggregate(a_p, xw1, b1_p, tile, tile, "relu", hid, bf)
    # TODO(synk): F.dropout(training=self.training) — identity in eval mode; not applied.

    # layer 2: transform -> aggregate (masked log_softmax fused at final k)
    hw2 = _transform(h, w2_p, tile, bf)
    out_p = _aggregate(a_p, hw2, b2_p, tile, tile, "log_softmax", ncls,
                       jnp.float32)
    return out_p[:n, :ncls]


# ---------------------------------------------------------------------------
# Plain-JAX glue: dense A_hat = D^{-1/2} (A + I) D^{-1/2}
# ---------------------------------------------------------------------------
def build_normalized_adjacency(edge_index, num_nodes):
    # TODO(synk): large sparse graphs should use a gather-based aggregation
    # (scalar-prefetch CSR) instead of densifying the adjacency.
    src, dst = edge_index[0], edge_index[1]
    adj = jnp.zeros((num_nodes, num_nodes), jnp.float32)
    adj = adj.at[src, dst].set(1.0)
    adj = adj + jnp.eye(num_nodes, dtype=jnp.float32)  # self loops
    deg = jnp.sum(adj, axis=1)
    d_inv_sqrt = jnp.where(deg > 0, 1.0 / jnp.sqrt(deg), 0.0)
    return adj * d_inv_sqrt[:, None] * d_inv_sqrt[None, :]


def gcn_reference(a_hat, x, w1, b1, w2, b2):
    h = jnp.maximum(a_hat @ (x @ w1) + jnp.reshape(b1, (1, -1)), 0.0)
    logits = a_hat @ (h @ w2) + jnp.reshape(b2, (1, -1))
    return jax.nn.log_softmax(logits, axis=1)


if __name__ == "__main__":
    # Small synthetic graph consistent with the module:
    #   data.x: (N, num_node_features), data.edge_index: (2, E)
    N = 64            # number of nodes
    F_IN = 16         # data.num_node_features
    HID = 16          # conv1 hidden size (from the module)
    NUM_CLASSES = 8   # np.max(data.y) + 1

    key = jax.random.PRNGKey(0)
    kx, kw1, kw2 = jax.random.split(key, 3)

    x = jax.random.normal(kx, (N, F_IN), dtype=jnp.float32)

    # deterministic ring graph (bidirectional edges), E = 2N
    idx = jnp.arange(N, dtype=jnp.int32)
    nxt = (idx + 1) % N
    edge_index = jnp.stack(
        [jnp.concatenate([idx, nxt]), jnp.concatenate([nxt, idx])], axis=0
    )  # (2, 2N)

    a_hat = build_normalized_adjacency(edge_index, N)

    # deterministic (glorot-ish) parameter init; biases zero (GCNConv default)
    w1 = jax.random.normal(kw1, (F_IN, HID), dtype=jnp.float32) * (1.0 / jnp.sqrt(F_IN))
    b1 = jnp.zeros((1, HID), dtype=jnp.float32)
    w2 = jax.random.normal(kw2, (HID, NUM_CLASSES), dtype=jnp.float32) * (1.0 / jnp.sqrt(HID))
    b2 = jnp.zeros((1, NUM_CLASSES), dtype=jnp.float32)

    out = gcn_forward(a_hat, x, w1, b1, w2, b2)
    out = jax.block_until_ready(out)

    assert out.shape == (N, NUM_CLASSES)
    # log_softmax rows must sum (in prob space) to ~1
    row_sums = jnp.sum(jnp.exp(out), axis=1)
    assert bool(jnp.all(jnp.abs(row_sums - 1.0) < 1e-4))
    # match the f32 reference (loose tol: bf16 MXU operands)
    ref = gcn_reference(a_hat, x, w1, b1, w2, b2)
    assert bool(jnp.max(jnp.abs(out - ref)) < 0.25)

    print("KERNEL_OK")
</pallas_src>

<mosaic_0001>
module attributes {stable_mosaic.version = 11 : i64} {
  func.func @transform_kernel(%arg0: i32, %arg1: memref<128x128xbf16, #tpu.memory_space<vmem>>, %arg2: memref<128x128xbf16, #tpu.memory_space<vmem>>, %arg3: memref<128x128xbf16, #tpu.memory_space<vmem>>) attributes {dimension_semantics = [#tpu.dimension_semantics<parallel>], iteration_bounds = array<i64: 1>, scalar_prefetch = 0 : i64, scratch_operands = 0 : i64, tpu.core_type = #tpu.core_type<tc>, window_params = [{transform_indices = @transform_0, window_bounds = array<i64: 128, 128>}, {pipeline_mode = #tpu.pipeline_mode<synchronous>, transform_indices = @transform_1, window_bounds = array<i64: 128, 128>}, {transform_indices = @transform_2, window_bounds = array<i64: 128, 128>}]} {
    %c0 = arith.constant 0 : index
    %c0_0 = arith.constant 0 : index
    %0 = vector.load %arg1[%c0, %c0_0] : memref<128x128xbf16, #tpu.memory_space<vmem>>, vector<128x128xbf16>
    %c0_1 = arith.constant 0 : index
    %c0_2 = arith.constant 0 : index
    %1 = vector.load %arg2[%c0_1, %c0_2] : memref<128x128xbf16, #tpu.memory_space<vmem>>, vector<128x128xbf16>
    %cst = arith.constant dense<0.000000e+00> : vector<128x128xf32>
    %2 = tpu.matmul %0, %1, %cst {dimension_numbers = #tpu.dot_dimension_numbers<[1], [0], [0], [1], [0, 0, 1, 1], [], []>} : vector<128x128xbf16>, vector<128x128xbf16>, vector<128x128xf32> -> vector<128x128xf32>
    %3 = arith.truncf %2 : vector<128x128xf32> to vector<128x128xbf16>
    %c0_3 = arith.constant 0 : index
    %c0_4 = arith.constant 0 : index
    %4 = vector.load %arg3[%c0_3, %c0_4] : memref<128x128xbf16, #tpu.memory_space<vmem>>, vector<128x128xbf16>
    tpu.vector_store %arg3[%c0_3, %c0_4], %3 {strides = array<i32>} : memref<128x128xbf16, #tpu.memory_space<vmem>>, vector<128x128xbf16>,
    return
  }
  func.func @transform_0(%arg0: i32) -> (i32, i32) {
    %c0_i32 = arith.constant 0 : i32
    %c0_i32_0 = arith.constant 0 : i32
    return %arg0, %c0_i32 : i32, i32
  }
  func.func @transform_1(%arg0: i32) -> (i32, i32) {
    %c0_i32 = arith.constant 0 : i32
    %c0_i32_0 = arith.constant 0 : i32
    %c0_i32_1 = arith.constant 0 : i32
    return %c0_i32, %c0_i32_0 : i32, i32
  }
  func.func @transform_2(%arg0: i32) -> (i32, i32) {
    %c0_i32 = arith.constant 0 : i32
    %c0_i32_0 = arith.constant 0 : i32
    return %arg0, %c0_i32 : i32, i32
  }
}

</mosaic_0001>

<llo_original>
// kernel: tpu_custom_call.1
$region0: #{tpu_custom_call.1}
  #allocation0 [shape = 'u32[]', space=smem, size = 0x4, offset = 0x4, fixed_abs, tag = 'smem constant byte address 0x4 - core index']
  #allocation1 [shape = 'u32[72,128]{1,0:T(1,128)}', space=vmem, size = 0x9000, scoped, tag = 'internal scratch']
  %s0 = inlined_call_operand.hbm [shape: bf16[128,128], index: 0, kind: input, shape index: {}]
  %s1 = inlined_call_operand.hbm [shape: bf16[128,128], index: 1, kind: input, shape index: {}]
  %s2 = inlined_call_operand.hbm [shape: bf16[128,128], index: 2, kind: output, shape index: {}]
  %s3 = sld [smem:[#allocation0]]
  $region26: #{tpu_custom_call.1} parent=0
    _
  %s5 = ssub.s32 1, %s3
  %s6 = scalar_select 0, %s5, %s3
  $region1: #{tpu_custom_call.1} parent=0
    #allocation2 [shape = 'u8[32768]{0}', space=vmem, size = 0x8000, scoped, tag = 'input window, operand 0, single buffered']
    #allocation3 [shape = 's32[1]{0}', space=sflag, size = 0x4, scoped, tag = 'scoped memory for tpu_custom_call.1']
    #allocation4 [shape = 's32[1]{0}', space=sflag, size = 0x4, scoped, tag = 'scoped memory for tpu_custom_call.1']
    #allocation5 [shape = 'u8[32768]{0}', space=vmem, size = 0x8000, scoped, tag = 'input window, operand 1, single buffered']
    #allocation6 [shape = 's32[1]{0}', space=sflag, size = 0x4, scoped, tag = 'scoped memory for tpu_custom_call.1']
    #allocation7 [shape = 'u8[32768]{0}', space=vmem, size = 0x8000, scoped, tag = 'output window, operand 0, single buffered']
    %7 = vsyncpa [#allocation3], 0
    %8 = vsyncpa [#allocation6], 0
    %9 = vsyncpa [#allocation4], 0
    // Predicated region
    $region2: #{tpu_custom_call.1} parent=1 // pred_check
      _
    $region3: #{tpu_custom_call.1} parent=1 // pred_check_branch
      %11 = sbr.rel (0) target = $region5
    $region4: #{tpu_custom_call.1} parent=1 // pred_region
      %13 = vsyncadd [#allocation3], 0
      %s14 = sshll.u32 %s0, 4
      %s15 = int_to_ptr.hbm [resolvable:$true] %s14
      %s16 = sshll.u32 [#allocation2], 4
      %s17 = int_to_ptr.vmem [resolvable:$true] %s16
      %22 = dma.hbm_to_vmem [thread:$0]  %s15, 1024, %s17, [#allocation3], 64, 64, 4
    $region5: #{tpu_custom_call.1} parent=1 // pred_fallthru
      _
    // Predicated region
    $region6: #{tpu_custom_call.1} parent=1 // pred_check
      _
    $region7: #{tpu_custom_call.1} parent=1 // pred_check_branch
      %24 = sbr.rel (0) target = $region9
    $region8: #{tpu_custom_call.1} parent=1 // pred_region
      %26 = vsyncadd [#allocation6], 0
      %s27 = sshll.u32 %s1, 4
      %s28 = int_to_ptr.hbm [resolvable:$true] %s27
      %s29 = sshll.u32 [#allocation5], 4
      %s30 = int_to_ptr.vmem [resolvable:$true] %s29
      %35 = dma.hbm_to_vmem [thread:$0]  %s28, 1024, %s30, [#allocation6], 64, 64, 4
    $region9: #{tpu_custom_call.1} parent=1 // pred_fallthru
      _
    // Predicated region
    $region10: #{tpu_custom_call.1} parent=1 // pred_check
      _
    $region11: #{tpu_custom_call.1} parent=1 // pred_check_branch
      %37 = sbr.rel (0) target = $region13
    $region12: #{tpu_custom_call.1} parent=1 // pred_region
      %39 = dma.done [#allocation3], 1024
    $region13: #{tpu_custom_call.1} parent=1 // pred_fallthru
      _
    // Predicated region
    $region14: #{tpu_custom_call.1} parent=1 // pred_check
      _
    $region15: #{tpu_custom_call.1} parent=1 // pred_check_branch
      %41 = sbr.rel (0) target = $region17
    $region16: #{tpu_custom_call.1} parent=1 // pred_region
      %43 = dma.done [#allocation6], 1024
    $region17: #{tpu_custom_call.1} parent=1 // pred_fallthru
      _
    %v44 = vld [vmem:[#allocation2] sm:$0xf]
    %v45 = vld [vmem:[#allocation2 + $0x4] sm:$0xf]
    %v46 = vld [vmem:[#allocation2 + $0x8] sm:$0xf]
    %v47 = vld [vmem:[#allocation2 + $0xc] sm:$0xf]
    %v48 = vld [vmem:[#allocation2 + $0x10] sm:$0xf]
    %v49 = vld [vmem:[#allocation2 + $0x14] sm:$0xf]
    %v50 = vld [vmem:[#allocation2 + $0x18] sm:$0xf]
    %v51 = vld [vmem:[#allocation2 + $0x1c] sm:$0xf]
    %v52 = vld [vmem:[#allocation2 + $0x20] sm:$0xf]
    %v53 = vld [vmem:[#allocation2 + $0x24] sm:$0xf]
    %v54 = vld [vmem:[#allocation2 + $0x28] sm:$0xf]
    %v55 = vld [vmem:[#allocation2 + $0x2c] sm:$0xf]
    %v56 = vld [vmem:[#allocation2 + $0x30] sm:$0xf]
    %v57 = vld [vmem:[#allocation2 + $0x34] sm:$0xf]
    %v58 = vld [vmem:[#allocation2 + $0x38] sm:$0xf]
    %v59 = vld [vmem:[#allocation2 + $0x3c] sm:$0xf]
    %v60 = vld [vmem:[#allocation5] sm:$0xf]
    %v61 = vld [vmem:[#allocation5 + $0x4] sm:$0xf]
    %v62 = vld [vmem:[#allocation5 + $0x8] sm:$0xf]
    %v63 = vld [vmem:[#allocation5 + $0xc] sm:$0xf]
    %v64 = vld [vmem:[#allocation5 + $0x10] sm:$0xf]
    %v65 = vld [vmem:[#allocation5 + $0x14] sm:$0xf]
    %v66 = vld [vmem:[#allocation5 + $0x18] sm:$0xf]
    %v67 = vld [vmem:[#allocation5 + $0x1c] sm:$0xf]
    %v68 = vld [vmem:[#allocation5 + $0x20] sm:$0xf]
    %v69 = vld [vmem:[#allocation5 + $0x24] sm:$0xf]
    %v70 = vld [vmem:[#allocation5 + $0x28] sm:$0xf]
    %v71 = vld [vmem:[#allocation5 + $0x2c] sm:$0xf]
    %v72 = vld [vmem:[#allocation5 + $0x30] sm:$0xf]
    %v73 = vld [vmem:[#allocation5 + $0x34] sm:$0xf]
    %v74 = vld [vmem:[#allocation5 + $0x38] sm:$0xf]
    %v75 = vld [vmem:[#allocation5 + $0x3c] sm:$0xf]
    %v92 = vunpack.c.l.b16 %v44
    %v93 = vunpack.c.l.b16 %v45
    %v94 = vunpack.c.l.b16 %v46
    %v95 = vunpack.c.l.b16 %v47
    %v96 = vunpack.c.l.b16 %v48
    %v97 = vunpack.c.l.b16 %v49
    %v98 = vunpack.c.l.b16 %v50
    %v99 = vunpack.c.l.b16 %v51
    %v100 = vunpack.c.l.b16 %v52
    %v101 = vunpack.c.l.b16 %v53
    %v102 = vunpack.c.l.b16 %v54
    %v103 = vunpack.c.l.b16 %v55
    %v104 = vunpack.c.l.b16 %v56
    %v105 = vunpack.c.l.b16 %v57
    %v106 = vunpack.c.l.b16 %v58
    %v107 = vunpack.c.l.b16 %v59
    %v108 = vpack.c.b16 %v93, %v92
    %v109 = vpack.c.b16 %v95, %v94
    %v110 = vpack.c.b16 %v97, %v96
    %v111 = vpack.c.b16 %v99, %v98
    %v112 = vpack.c.b16 %v101, %v100
    %v113 = vpack.c.b16 %v103, %v102
    %v114 = vpack.c.b16 %v105, %v104
    %v115 = vpack.c.b16 %v107, %v106
    %v140 = vunpack.c.l.b16 %v60
    %v141 = vunpack.c.l.b16 %v61
    %v142 = vunpack.c.l.b16 %v62
    %v143 = vunpack.c.l.b16 %v63
    %v144 = vunpack.c.l.b16 %v64
    %v145 = vunpack.c.l.b16 %v65
    %v146 = vunpack.c.l.b16 %v66
    %v147 = vunpack.c.l.b16 %v67
    %v148 = vunpack.c.l.b16 %v68
    %v149 = vunpack.c.l.b16 %v69
    %v150 = vunpack.c.l.b16 %v70
    %v151 = vunpack.c.l.b16 %v71
    %v152 = vunpack.c.l.b16 %v72
    %v153 = vunpack.c.l.b16 %v73
    %v154 = vunpack.c.l.b16 %v74
    %v155 = vunpack.c.l.b16 %v75
    %v156 = vpack.c.b16 %v141, %v140
    %v157 = vpack.c.b16 %v143, %v142
    %v158 = vpack.c.b16 %v145, %v144
    %v159 = vpack.c.b16 %v147, %v146
    %v160 = vpack.c.b16 %v149, %v148
    %v161 = vpack.c.b16 %v151, %v150
    %v162 = vpack.c.b16 %v153, %v152
    %v163 = vpack.c.b16 %v155, %v154
    %172 = vmatpush.bf16.msra.mxu0 %v163
    %173 = vmatpush.bf16.msra.mxu0 %v162
    %174 = vmatpush.bf16.msra.mxu0 %v161
    %175 = vmatpush.bf16.msra.mxu0 %v160
    %176 = vmatpush.bf16.msra.mxu0 %v159
    %177 = vmatpush.bf16.msra.mxu0 %v158
    %178 = vmatpush.bf16.msra.mxu0 %v157
    %179 = vmatpush.bf16.msra.mxu0 %v156
    %180 = vmatmul.bf16.gmra.mxu0 %v108
    %v181 = vpop.f32.mrf.mxu0
    %v182 = vadd.f32 0.0, %v181
    %v183 = vpop.f32.mrf.mxu0
    %v184 = vadd.f32 0.0, %v183
    %185 = vmatmul.bf16.gmra.mxu0 %v109
    %v186 = vpop.f32.mrf.mxu0
    %v187 = vadd.f32 0.0, %v186
    %v188 = vpop.f32.mrf.mxu0
    %v189 = vadd.f32 0.0, %v188
    %190 = vmatmul.bf16.gmra.mxu0 %v110
    %v191 = vpop.f32.mrf.mxu0
    %v192 = vadd.f32 0.0, %v191
    %v193 = vpop.f32.mrf.mxu0
    %v194 = vadd.f32 0.0, %v193
    %195 = vmatmul.bf16.gmra.mxu0 %v111
    %v196 = vpop.f32.mrf.mxu0
    %v197 = vadd.f32 0.0, %v196
    %v198 = vpop.f32.mrf.mxu0
    %v199 = vadd.f32 0.0, %v198
    %200 = vmatmul.bf16.gmra.mxu0 %v112
    %v201 = vpop.f32.mrf.mxu0
    %v202 = vadd.f32 0.0, %v201
    %v203 = vpop.f32.mrf.mxu0
    %v204 = vadd.f32 0.0, %v203
    %205 = vmatmul.bf16.gmra.mxu0 %v113
    %v206 = vpop.f32.mrf.mxu0
    %v207 = vadd.f32 0.0, %v206
    %v208 = vpop.f32.mrf.mxu0
    %v209 = vadd.f32 0.0, %v208
    %210 = vmatmul.bf16.gmra.mxu0 %v114
    %v211 = vpop.f32.mrf.mxu0
    %v212 = vadd.f32 0.0, %v211
    %v213 = vpop.f32.mrf.mxu0
    %v214 = vadd.f32 0.0, %v213
    %215 = vmatmul.bf16.gmra.mxu0 %v115
    %v216 = vpop.f32.mrf.mxu0
    %v217 = vadd.f32 0.0, %v216
    %v218 = vpop.f32.mrf.mxu0
    %v219 = vadd.f32 0.0, %v218
    %220 = vdwg.mxu0
    %v221 = vpack.c.bf16 %v182, %v182
    %v222 = vpack.c.bf16 %v184, %v184
    %v223 = vpack.c.bf16 %v187, %v187
    %v224 = vpack.c.bf16 %v189, %v189
    %v225 = vpack.c.bf16 %v192, %v192
    %v226 = vpack.c.bf16 %v194, %v194
    %v227 = vpack.c.bf16 %v197, %v197
    %v228 = vpack.c.bf16 %v199, %v199
    %v229 = vpack.c.bf16 %v202, %v202
    %v230 = vpack.c.bf16 %v204, %v204
    %v231 = vpack.c.bf16 %v207, %v207
    %v232 = vpack.c.bf16 %v209, %v209
    %v233 = vpack.c.bf16 %v212, %v212
    %v234 = vpack.c.bf16 %v214, %v214
    %v235 = vpack.c.bf16 %v217, %v217
    %v236 = vpack.c.bf16 %v219, %v219
    %237 = vst [vmem:[#allocation7] sm:$0xf] %v221
    %238 = vst [vmem:[#allocation7 + $0x4] sm:$0xf] %v222
    %239 = vst [vmem:[#allocation7 + $0x8] sm:$0xf] %v223
    %240 = vst [vmem:[#allocation7 + $0xc] sm:$0xf] %v224
    %241 = vst [vmem:[#allocation7 + $0x10] sm:$0xf] %v225
    %242 = vst [vmem:[#allocation7 + $0x14] sm:$0xf] %v226
    %243 = vst [vmem:[#allocation7 + $0x18] sm:$0xf] %v227
    %244 = vst [vmem:[#allocation7 + $0x1c] sm:$0xf] %v228
    %245 = vst [vmem:[#allocation7 + $0x20] sm:$0xf] %v229
    %246 = vst [vmem:[#allocation7 + $0x24] sm:$0xf] %v230
    %247 = vst [vmem:[#allocation7 + $0x28] sm:$0xf] %v231
    %248 = vst [vmem:[#allocation7 + $0x2c] sm:$0xf] %v232
    %249 = vst [vmem:[#allocation7 + $0x30] sm:$0xf] %v233
    %250 = vst [vmem:[#allocation7 + $0x34] sm:$0xf] %v234
    %251 = vst [vmem:[#allocation7 + $0x38] sm:$0xf] %v235
    %252 = vst [vmem:[#allocation7 + $0x3c] sm:$0xf] %v236
    // Predicated region
    $region18: #{tpu_custom_call.1} parent=1 // pred_check
      _
    $region19: #{tpu_custom_call.1} parent=1 // pred_check_branch
      %254 = sbr.rel (0) target = $region21
    $region20: #{tpu_custom_call.1} parent=1 // pred_region
      %256 = vsyncadd [#allocation4], 0
      %s257 = sshll.u32 [#allocation7], 4
      %s258 = int_to_ptr.vmem [resolvable:$true] %s257
      %s259 = sshll.u32 %s2, 4
      %s260 = int_to_ptr.hbm [resolvable:$true] %s259
      %265 = dma.vmem_to_hbm [thread:$0]  %s258, 1024, %s260, [#allocation4], 64, 64, 4
    $region21: #{tpu_custom_call.1} parent=1 // pred_fallthru
      _
    // Predicated region
    $region22: #{tpu_custom_call.1} parent=1 // pred_check
      _
    $region23: #{tpu_custom_call.1} parent=1 // pred_check_branch
      %267 = sbr.rel (0) target = $region25
    $region24: #{tpu_custom_call.1} parent=1 // pred_region
      %269 = dma.done [#allocation4], 1024
    $region25: #{tpu_custom_call.1} parent=1 // pred_fallthru
      _
    %270 = vsyncpa [#allocation3], 1
    %271 = vsyncpa [#allocation6], 1
    %272 = vsyncpa [#allocation4], 1

</llo_original>
